<compile_context>
chip_gen: v5e
topology: v5e:2x2
jax: 0.10.0
libtpu: 0.0.40
codegen_flags: <defaults>
</compile_context>

<pallas_src>
import functools
import math

import jax
import jax.numpy as jnp
import numpy as np
from jax.experimental import pallas as pl
from jax.experimental.pallas import tpu as pltpu

_EPS = 1e-5
_MB = 1024 * 1024


def _cdiv(a, b):
    return -(-a // b)


def _round_up(a, b):
    return _cdiv(a, b) * b


# ---------------------------------------------------------------------------
# Per-generation tuning: (f32 working-block budget, scoped VMEM limit, #TCs)
# ---------------------------------------------------------------------------
def _tpu_tuning():
    kind = ""
    try:
        kind = jax.devices()[0].device_kind.lower()
    except Exception:
        pass
    vmem_cap = None
    try:
        vmem_cap = int(pltpu.get_tpu_info().vmem_capacity_bytes)
    except Exception:
        pass

    budget, limit, num_tc = 2 * _MB, 32 * _MB, 1            # conservative default
    if "v5 lite" in kind or "v5e" in kind or "v5lite" in kind:
        budget, limit, num_tc = 2 * _MB, 48 * _MB, 1         # v5e: keep 2 MiB blocks
    elif "v6" in kind:
        budget, limit, num_tc = 4 * _MB, 64 * _MB, 1         # v6e: big VMEM cushion
    elif "7" in kind:
        budget, limit, num_tc = 3 * _MB, 48 * _MB, 2         # v7x: 64 MiB VMEM, 2 TCs
    elif vmem_cap is not None and vmem_cap <= 64 * _MB:
        budget, limit, num_tc = 3 * _MB, 48 * _MB, 2         # small-VMEM chip -> v7x-like
    if vmem_cap is not None:
        limit = min(limit, vmem_cap * 3 // 4)                # stay well under physical
    return budget, limit, num_tc


def _fold_factor(c, rows):
    """Smallest k with k*C a multiple of 128 (if cheap and it divides rows)."""
    if c % 128 == 0:
        return 1
    k = 128 // math.gcd(c, 128)        # lcm(C, 128) // C
    if k <= 16 and rows % k == 0:
        return k
    return 1


def _pick_row_tile(n_rows, width, budget_f32_bytes, itemsize, num_tc):
    """Row tile from an f32 working-block budget, sublane aligned."""
    sublane = {4: 8, 2: 16, 1: 32}.get(itemsize, 8)
    rt = budget_f32_bytes // (width * 4)
    rt = max(min(rt, 8192), sublane)
    rt = (rt // sublane) * sublane
    if num_tc > 1:
        # >= 2 pipelined grid steps per TensorCore (v7x) so the prologue DMA is
        # hidden on both cores; on single-TC chips don't split (pure overhead).
        min_steps = 2 * num_tc
        if n_rows >= min_steps * sublane:
            rt = min(rt, _round_up(_cdiv(n_rows, min_steps), sublane))
    if rt >= n_rows:
        rt = _round_up(n_rows, sublane)   # single (possibly ragged) block
    return rt


# ---------------------------------------------------------------------------
# Kernels
# ---------------------------------------------------------------------------
def _bf16_split_dot(v, rhs_bf16):
    """f32 (R, W) @ exact-bf16 0/1 (W, N) with two native bf16 MXU passes.

    The RHS is a 0/1 matrix (exact in bf16), so splitting only the LHS into
    hi+lo bf16 pieces keeps ~16-17 mantissa bits of v (residual ~2^-16) at a
    third of the extended-slot pushes of a precision=HIGHEST f32 matmul.
    """
    hi = v.astype(jnp.bfloat16)
    lo = (v - hi.astype(jnp.float32)).astype(jnp.bfloat16)
    return (jnp.dot(hi, rhs_bf16, preferred_element_type=jnp.float32)
            + jnp.dot(lo, rhs_bf16, preferred_element_type=jnp.float32))


def _ln_kernel_folded(x_ref, w_ref, b_ref, blk_ref, o_ref, *, inv_c):
    """Fold path: block is (R, W), W = k*C; row r holds k logical LayerNorm rows.

    blk_ref is the (W, W) block-diagonal 0/1 matrix blk[a, b] = (a//C == b//C),
    so one MXU matmul per statistic fuses the per-segment reduction AND the
    broadcast of the result back to every lane of its segment.
    """
    x = x_ref[...].astype(jnp.float32)                       # (R, W)
    blk = blk_ref[...]                                       # (W, W) bf16 0/1
    mu = _bf16_split_dot(x, blk) * inv_c                     # per-segment mean
    ex2 = _bf16_split_dot(x * x, blk) * inv_c                # per-segment E[x^2]
    var = jnp.maximum(ex2 - mu * mu, 0.0)                    # unbiased=False
    inv = jax.lax.rsqrt(var + _EPS)
    w = w_ref[...].astype(jnp.float32)                       # (1, W)
    b = b_ref[...].astype(jnp.float32)                       # (1, W)
    o_ref[...] = ((x - mu) * inv * w + b).astype(o_ref.dtype)


def _ln_kernel_plain(x_ref, w_ref, b_ref, o_ref, *, inv_c, c, masked):
    """Fallback path: block (R, Cp); Cp = C padded up to a multiple of 128 with
    zeros, so stats are lane-dense sums scaled by 1/C; the deviation is masked
    before squaring so the padded lanes don't pollute the variance."""
    x = x_ref[...].astype(jnp.float32)                       # (R, Cp), pad lanes = 0
    mu = jnp.sum(x, axis=-1, keepdims=True) * inv_c
    d = x - mu
    if masked:
        lane = jax.lax.broadcasted_iota(jnp.int32, x.shape, x.ndim - 1)
        d = jnp.where(lane < c, d, 0.0)
    var = jnp.sum(d * d, axis=-1, keepdims=True) * inv_c
    inv = jax.lax.rsqrt(var + _EPS)
    w = w_ref[...].astype(jnp.float32)
    b = b_ref[...].astype(jnp.float32)
    o_ref[...] = (d * inv * w + b).astype(o_ref.dtype)


# ---------------------------------------------------------------------------
# Wrapper
# ---------------------------------------------------------------------------
def withbias_layernorm(x, weight, bias):
    """x: (..., C); weight, bias: (C,). Matches torch WithBias_LayerNorm.forward."""
    orig_shape = x.shape
    C = int(orig_shape[-1])
    rows = int(np.prod(orig_shape[:-1])) if len(orig_shape) > 1 else 1
    itemsize = jnp.dtype(x.dtype).itemsize
    budget, vmem_limit, num_tc = _tpu_tuning()

    weight = weight.reshape(1, C)
    bias = bias.reshape(1, C)
    compiler_params = pltpu.CompilerParams(
        dimension_semantics=("parallel",),
        vmem_limit_bytes=vmem_limit,
    )

    k = _fold_factor(C, rows)
    if k > 1:
        # ----- hot path: lane-dense fold, fused MXU reduce+broadcast -----
        W = k * C
        Rf = rows // k
        x2 = x.reshape(Rf, W)                              # contiguous regroup: free
        w2 = jnp.tile(weight, (1, k))                      # (1, W)
        b2 = jnp.tile(bias, (1, k))                        # (1, W)
        seg = np.arange(W) // C
        blk = jnp.asarray((seg[:, None] == seg[None, :]).astype(np.float32),
                          dtype=jnp.bfloat16)              # (W, W) block-diag 0/1

        row_tile = _pick_row_tile(Rf, W, budget, itemsize, num_tc)
        grid = (_cdiv(Rf, row_tile),)
        x_spec = pl.BlockSpec((row_tile, W), lambda i: (i, 0))
        p_spec = pl.BlockSpec((1, W), lambda i: (0, 0))
        blk_spec = pl.BlockSpec((W, W), lambda i: (0, 0))
        o_spec = pl.BlockSpec((row_tile, W), lambda i: (i, 0))

        out = pl.pallas_call(
            functools.partial(_ln_kernel_folded, inv_c=1.0 / C),
            out_shape=jax.ShapeDtypeStruct((Rf, W), x.dtype),
            grid_spec=pltpu.PrefetchScalarGridSpec(
                num_scalar_prefetch=0,
                grid=grid,
                in_specs=[x_spec, p_spec, p_spec, blk_spec],
                out_specs=o_spec,
            ),
            compiler_params=compiler_params,
            cost_estimate=pl.CostEstimate(
                flops=int(8 * Rf * W * W),
                transcendentals=int(rows),
                bytes_accessed=int(2 * rows * C * itemsize + 2 * W * W + 4 * W),
            ),
        )(x2, w2, b2, blk)
        return out.reshape(orig_shape)

    # ----- fallback path: pad channels to a multiple of 128 (lane-dense) -----
    Cp = _round_up(C, 128)
    x2 = x.reshape(rows, C)
    w2, b2 = weight, bias
    if Cp != C:
        x2 = jnp.pad(x2, ((0, 0), (0, Cp - C)))
        w2 = jnp.pad(w2, ((0, 0), (0, Cp - C)))
        b2 = jnp.pad(b2, ((0, 0), (0, Cp - C)))

    row_tile = _pick_row_tile(rows, Cp, budget, itemsize, num_tc)
    grid = (_cdiv(rows, row_tile),)
    x_spec = pl.BlockSpec((row_tile, Cp), lambda i: (i, 0))
    p_spec = pl.BlockSpec((1, Cp), lambda i: (0, 0))
    o_spec = pl.BlockSpec((row_tile, Cp), lambda i: (i, 0))

    out = pl.pallas_call(
        functools.partial(_ln_kernel_plain, inv_c=1.0 / C, c=C, masked=(Cp != C)),
        out_shape=jax.ShapeDtypeStruct((rows, Cp), x.dtype),
        grid_spec=pltpu.PrefetchScalarGridSpec(
            num_scalar_prefetch=0,
            grid=grid,
            in_specs=[x_spec, p_spec, p_spec],
            out_specs=o_spec,
        ),
        compiler_params=compiler_params,
        cost_estimate=pl.CostEstimate(
            flops=int(10 * rows * C),
            transcendentals=int(rows),
            bytes_accessed=int(2 * rows * Cp * itemsize + 4 * Cp),
        ),
    )(x2, w2, b2)
    if Cp != C:
        out = out[:, :C]
    return out.reshape(orig_shape)


# ---------------------------------------------------------------------------
# Reference + self-test
# ---------------------------------------------------------------------------
def _reference(x, weight, bias):
    mu = jnp.mean(x, axis=-1, keepdims=True)
    sigma = jnp.mean((x - mu) ** 2, axis=-1, keepdims=True)   # unbiased=False
    return (x - mu) / jnp.sqrt(sigma + _EPS) * weight + bias


if __name__ == "__main__":
    key = jax.random.PRNGKey(0)
    k1, k2, k3 = jax.random.split(key, 3)

    # Shapes consistent with the module's use in the UNet:
    # to_3d(x): (B, C, H, W) -> (B, H*W, C); normalize over channels C=32.
    B, H, Wsp, C = 2, 16, 16, 32
    x = jax.random.normal(k1, (B, H * Wsp, C), dtype=jnp.float32) * 2.0 + 0.5
    weight = 1.0 + 0.1 * jax.random.normal(k2, (C,), dtype=jnp.float32)
    bias = 0.1 * jax.random.normal(k3, (C,), dtype=jnp.float32)

    out = jax.block_until_ready(withbias_layernorm(x, weight, bias))
    ref = _reference(x, weight, bias)
    assert out.shape == x.shape and out.dtype == x.dtype
    assert jnp.allclose(out, ref, atol=1e-4, rtol=1e-4), "fold-path mismatch"

    # Fallback (pad-to-128) path: awkward C that cannot be folded lane-dense.
    C2 = 100
    x_b = jax.random.normal(k1, (2, 8, C2), dtype=jnp.float32)
    w_b = 1.0 + 0.05 * jax.random.normal(k2, (C2,), dtype=jnp.float32)
    b_b = 0.05 * jax.random.normal(k3, (C2,), dtype=jnp.float32)
    out_b = jax.block_until_ready(withbias_layernorm(x_b, w_b, b_b))
    ref_b = _reference(x_b, w_b, b_b)
    assert jnp.allclose(out_b, ref_b, atol=1e-5, rtol=1e-5), "plain-path mismatch"

    # Odd row count / single ragged block (rows not divisible by the fold factor).
    x_c = jax.random.normal(k2, (7, C), dtype=jnp.float32)
    out_c = jax.block_until_ready(withbias_layernorm(x_c, weight, bias))
    ref_c = _reference(x_c, weight, bias)
    assert jnp.allclose(out_c, ref_c, atol=1e-4, rtol=1e-4), "odd-rows mismatch"

    print("KERNEL_OK")
</pallas_src>

<mosaic_0001>
module attributes {stable_mosaic.version = 11 : i64} {
  func.func @_ln_kernel_folded(%arg0: i32, %arg1: memref<128x128xf32, #tpu.memory_space<vmem>>, %arg2: memref<1x128xf32, #tpu.memory_space<vmem>>, %arg3: memref<1x128xf32, #tpu.memory_space<vmem>>, %arg4: memref<128x128xbf16, #tpu.memory_space<vmem>>, %arg5: memref<128x128xf32, #tpu.memory_space<vmem>>) attributes {dimension_semantics = [#tpu.dimension_semantics<parallel>], iteration_bounds = array<i64: 1>, scalar_prefetch = 0 : i64, scratch_operands = 0 : i64, tpu.core_type = #tpu.core_type<tc>, window_params = [{transform_indices = @transform_0, window_bounds = array<i64: 128, 128>}, {pipeline_mode = #tpu.pipeline_mode<synchronous>, transform_indices = @transform_1, window_bounds = array<i64: 1, 128>}, {pipeline_mode = #tpu.pipeline_mode<synchronous>, transform_indices = @transform_2, window_bounds = array<i64: 1, 128>}, {pipeline_mode = #tpu.pipeline_mode<synchronous>, transform_indices = @transform_3, window_bounds = array<i64: 128, 128>}, {transform_indices = @transform_4, window_bounds = array<i64: 128, 128>}]} {
    %c0 = arith.constant 0 : index
    %c0_0 = arith.constant 0 : index
    %0 = vector.load %arg1[%c0, %c0_0] : memref<128x128xf32, #tpu.memory_space<vmem>>, vector<128x128xf32>
    %c0_1 = arith.constant 0 : index
    %c0_2 = arith.constant 0 : index
    %1 = vector.load %arg4[%c0_1, %c0_2] : memref<128x128xbf16, #tpu.memory_space<vmem>>, vector<128x128xbf16>
    %2 = arith.truncf %0 : vector<128x128xf32> to vector<128x128xbf16>
    %3 = arith.extf %2 : vector<128x128xbf16> to vector<128x128xf32>
    %4 = arith.subf %0, %3 : vector<128x128xf32>
    %5 = arith.truncf %4 : vector<128x128xf32> to vector<128x128xbf16>
    %cst = arith.constant dense<0.000000e+00> : vector<128x128xf32>
    %6 = tpu.matmul %2, %1, %cst {dimension_numbers = #tpu.dot_dimension_numbers<[1], [0], [0], [1], [0, 0, 1, 1], [], []>} : vector<128x128xbf16>, vector<128x128xbf16>, vector<128x128xf32> -> vector<128x128xf32>
    %cst_3 = arith.constant dense<0.000000e+00> : vector<128x128xf32>
    %7 = tpu.matmul %5, %1, %cst_3 {dimension_numbers = #tpu.dot_dimension_numbers<[1], [0], [0], [1], [0, 0, 1, 1], [], []>} : vector<128x128xbf16>, vector<128x128xbf16>, vector<128x128xf32> -> vector<128x128xf32>
    %8 = arith.addf %6, %7 : vector<128x128xf32>
    %cst_4 = arith.constant 3.125000e-02 : f32
    %9 = vector.broadcast %cst_4 : f32 to vector<128x128xf32>
    %10 = arith.mulf %8, %9 : vector<128x128xf32>
    %11 = arith.mulf %0, %0 : vector<128x128xf32>
    %12 = arith.truncf %11 : vector<128x128xf32> to vector<128x128xbf16>
    %13 = arith.extf %12 : vector<128x128xbf16> to vector<128x128xf32>
    %14 = arith.subf %11, %13 : vector<128x128xf32>
    %15 = arith.truncf %14 : vector<128x128xf32> to vector<128x128xbf16>
    %cst_5 = arith.constant dense<0.000000e+00> : vector<128x128xf32>
    %16 = tpu.matmul %12, %1, %cst_5 {dimension_numbers = #tpu.dot_dimension_numbers<[1], [0], [0], [1], [0, 0, 1, 1], [], []>} : vector<128x128xbf16>, vector<128x128xbf16>, vector<128x128xf32> -> vector<128x128xf32>
    %cst_6 = arith.constant dense<0.000000e+00> : vector<128x128xf32>
    %17 = tpu.matmul %15, %1, %cst_6 {dimension_numbers = #tpu.dot_dimension_numbers<[1], [0], [0], [1], [0, 0, 1, 1], [], []>} : vector<128x128xbf16>, vector<128x128xbf16>, vector<128x128xf32> -> vector<128x128xf32>
    %18 = arith.addf %16, %17 : vector<128x128xf32>
    %cst_7 = arith.constant 3.125000e-02 : f32
    %19 = vector.broadcast %cst_7 : f32 to vector<128x128xf32>
    %20 = arith.mulf %18, %19 : vector<128x128xf32>
    %21 = arith.mulf %10, %10 : vector<128x128xf32>
    %22 = arith.subf %20, %21 : vector<128x128xf32>
    %cst_8 = arith.constant 0.000000e+00 : f32
    %23 = vector.broadcast %cst_8 : f32 to vector<128x128xf32>
    %24 = arith.maximumf %22, %23 : vector<128x128xf32>
    %cst_9 = arith.constant 9.99999974E-6 : f32
    %25 = vector.broadcast %cst_9 : f32 to vector<128x128xf32>
    %26 = arith.addf %24, %25 : vector<128x128xf32>
    %27 = math.rsqrt %26 : vector<128x128xf32>
    %c0_10 = arith.constant 0 : index
    %c0_11 = arith.constant 0 : index
    %28 = vector.load %arg2[%c0_10, %c0_11] : memref<1x128xf32, #tpu.memory_space<vmem>>, vector<1x128xf32>
    %c0_12 = arith.constant 0 : index
    %c0_13 = arith.constant 0 : index
    %29 = vector.load %arg3[%c0_12, %c0_13] : memref<1x128xf32, #tpu.memory_space<vmem>>, vector<1x128xf32>
    %30 = arith.subf %0, %10 : vector<128x128xf32>
    %31 = arith.mulf %30, %27 : vector<128x128xf32>
    %32 = vector.broadcast %28 : vector<1x128xf32> to vector<128x128xf32>
    %33 = arith.mulf %31, %32 : vector<128x128xf32>
    %34 = vector.broadcast %29 : vector<1x128xf32> to vector<128x128xf32>
    %35 = arith.addf %33, %34 : vector<128x128xf32>
    %c0_14 = arith.constant 0 : index
    %c0_15 = arith.constant 0 : index
    %36 = vector.load %arg5[%c0_14, %c0_15] : memref<128x128xf32, #tpu.memory_space<vmem>>, vector<128x128xf32>
    tpu.vector_store %arg5[%c0_14, %c0_15], %35 {strides = array<i32>} : memref<128x128xf32, #tpu.memory_space<vmem>>, vector<128x128xf32>,
    return
  }
  func.func @transform_0(%arg0: i32) -> (i32, i32) {
    %c0_i32 = arith.constant 0 : i32
    %c0_i32_0 = arith.constant 0 : i32
    return %arg0, %c0_i32 : i32, i32
  }
  func.func @transform_1(%arg0: i32) -> (i32, i32) {
    %c0_i32 = arith.constant 0 : i32
    %c0_i32_0 = arith.constant 0 : i32
    %c0_i32_1 = arith.constant 0 : i32
    return %c0_i32, %c0_i32_0 : i32, i32
  }
  func.func @transform_2(%arg0: i32) -> (i32, i32) {
    %c0_i32 = arith.constant 0 : i32
    %c0_i32_0 = arith.constant 0 : i32
    %c0_i32_1 = arith.constant 0 : i32
    return %c0_i32, %c0_i32_0 : i32, i32
  }
  func.func @transform_3(%arg0: i32) -> (i32, i32) {
    %c0_i32 = arith.constant 0 : i32
    %c0_i32_0 = arith.constant 0 : i32
    %c0_i32_1 = arith.constant 0 : i32
    return %c0_i32, %c0_i32_0 : i32, i32
  }
  func.func @transform_4(%arg0: i32) -> (i32, i32) {
    %c0_i32 = arith.constant 0 : i32
    %c0_i32_0 = arith.constant 0 : i32
    return %arg0, %c0_i32 : i32, i32
  }
}

</mosaic_0001>

<llo_original>
// kernel: tpu_custom_call.1
$region0: #{tpu_custom_call.1}
  #allocation0 [shape = 'u32[]', space=smem, size = 0x4, offset = 0x4, fixed_abs, tag = 'smem constant byte address 0x4 - core index']
  #allocation1 [shape = 'u32[72,128]{1,0:T(1,128)}', space=vmem, size = 0x9000, scoped, tag = 'internal scratch']
  %s0 = inlined_call_operand.hbm [shape: f32[128,128], index: 0, kind: input, shape index: {}]
  %s1 = inlined_call_operand.hbm [shape: f32[1,128], index: 1, kind: input, shape index: {}]
  %s2 = inlined_call_operand.vmem [shape: f32[1,128], index: 2, kind: input, shape index: {}]
  %s3 = inlined_call_operand.hbm [shape: bf16[128,128], index: 3, kind: input, shape index: {}]
  %s4 = inlined_call_operand.hbm [shape: f32[128,128], index: 4, kind: output, shape index: {}]
  %s5 = sld [smem:[#allocation0]]
  $region38: #{tpu_custom_call.1} parent=0
    _
  %s7 = ssub.s32 1, %s5
  %s8 = scalar_select 0, %s7, %s5
  $region1: #{tpu_custom_call.1} parent=0
    #allocation2 [shape = 'u8[65536]{0}', space=vmem, size = 0x10000, scoped, tag = 'input window, operand 0, single buffered']
    #allocation3 [shape = 's32[1]{0}', space=sflag, size = 0x4, scoped, tag = 'scoped memory for tpu_custom_call.1']
    #allocation4 [shape = 's32[1]{0}', space=sflag, size = 0x4, scoped, tag = 'scoped memory for tpu_custom_call.1']
    #allocation5 [shape = 'u8[512]{0}', space=vmem, size = 0x400, scoped, tag = 'input window, operand 1, single buffered']
    #allocation6 [shape = 's32[1]{0}', space=sflag, size = 0x4, scoped, tag = 'scoped memory for tpu_custom_call.1']
    #allocation7 [shape = 'u8[32768]{0}', space=vmem, size = 0x8000, scoped, tag = 'input window, operand 3, single buffered']
    #allocation8 [shape = 'u8[65536]{0}', space=vmem, size = 0x10000, scoped, tag = 'output window, operand 0, single buffered']
    %9 = vsyncpa [#allocation3], 0
    %10 = vsyncpa [#allocation6], 0
    %11 = vsyncpa [#allocation4], 0
    // Predicated region
    $region2: #{tpu_custom_call.1} parent=1 // pred_check
      _
    $region3: #{tpu_custom_call.1} parent=1 // pred_check_branch
      %13 = sbr.rel (0) target = $region5
    $region4: #{tpu_custom_call.1} parent=1 // pred_region
      %15 = vsyncadd [#allocation3], 0
      %s16 = sshll.u32 %s0, 4
      %s17 = int_to_ptr.hbm [resolvable:$true] %s16
      %s18 = sshll.u32 [#allocation2], 4
      %s19 = int_to_ptr.vmem [resolvable:$true] %s18
      %24 = dma.hbm_to_vmem [thread:$0]  %s17, 2048, %s19, [#allocation3], 128, 128, 8
    $region5: #{tpu_custom_call.1} parent=1 // pred_fallthru
      _
    // Predicated region
    $region6: #{tpu_custom_call.1} parent=1 // pred_check
      _
    $region7: #{tpu_custom_call.1} parent=1 // pred_check_branch
      %26 = sbr.rel (0) target = $region9
    $region8: #{tpu_custom_call.1} parent=1 // pred_region
      %28 = vsyncadd [#allocation6], 0
      %s30 = sshll.u32 %s1, 4
      %s31 = int_to_ptr.hbm [resolvable:$true] %s30
      %s32 = sshll.u32 [#allocation5], 4
      %s33 = int_to_ptr.vmem [resolvable:$true] %s32
      %35 = dma.hbm_to_vmem [thread:$0]  %s31, 16, %s33, [#allocation6]
    $region9: #{tpu_custom_call.1} parent=1 // pred_fallthru
      _
    // Predicated region
    $region10: #{tpu_custom_call.1} parent=1 // pred_check
      _
    $region11: #{tpu_custom_call.1} parent=1 // pred_check_branch
      %37 = sbr.rel (0) target = $region13
    $region12: #{tpu_custom_call.1} parent=1 // pred_region
      _
    $region13: #{tpu_custom_call.1} parent=1 // pred_fallthru
      _
    // Predicated region
    $region14: #{tpu_custom_call.1} parent=1 // pred_check
      _
    $region15: #{tpu_custom_call.1} parent=1 // pred_check_branch
      %39 = sbr.rel (0) target = $region17
    $region16: #{tpu_custom_call.1} parent=1 // pred_region
      %41 = vsyncadd [#allocation6], 0
      %s42 = sshll.u32 %s3, 4
      %s43 = int_to_ptr.hbm [resolvable:$true] %s42
      %s44 = sshll.u32 [#allocation7], 4
      %s45 = int_to_ptr.vmem [resolvable:$true] %s44
      %50 = dma.hbm_to_vmem [thread:$0]  %s43, 1024, %s45, [#allocation6], 64, 64, 4
    $region17: #{tpu_custom_call.1} parent=1 // pred_fallthru
      _
    // Predicated region
    $region18: #{tpu_custom_call.1} parent=1 // pred_check
      _
    $region19: #{tpu_custom_call.1} parent=1 // pred_check_branch
      %52 = sbr.rel (0) target = $region21
    $region20: #{tpu_custom_call.1} parent=1 // pred_region
      %54 = dma.done [#allocation3], 2048
    $region21: #{tpu_custom_call.1} parent=1 // pred_fallthru
      _
    // Predicated region
    $region22: #{tpu_custom_call.1} parent=1 // pred_check
      _
    $region23: #{tpu_custom_call.1} parent=1 // pred_check_branch
      %56 = sbr.rel (0) target = $region25
    $region24: #{tpu_custom_call.1} parent=1 // pred_region
      %58 = dma.done [#allocation6], 16
    $region25: #{tpu_custom_call.1} parent=1 // pred_fallthru
      _
    // Predicated region
    $region26: #{tpu_custom_call.1} parent=1 // pred_check
      _
    $region27: #{tpu_custom_call.1} parent=1 // pred_check_branch
      %60 = sbr.rel (0) target = $region29
    $region28: #{tpu_custom_call.1} parent=1 // pred_region
      %62 = dma.done [#allocation6], 1024
    $region29: #{tpu_custom_call.1} parent=1 // pred_fallthru
      _
    %v63 = vld [vmem:[#allocation2] sm:$0xff]
    %v64 = vld [vmem:[#allocation2 + $0x8] sm:$0xff]
    %v65 = vld [vmem:[#allocation2 + $0x10] sm:$0xff]
    %v66 = vld [vmem:[#allocation2 + $0x18] sm:$0xff]
    %v67 = vld [vmem:[#allocation2 + $0x20] sm:$0xff]
    %v68 = vld [vmem:[#allocation2 + $0x28] sm:$0xff]
    %v69 = vld [vmem:[#allocation2 + $0x30] sm:$0xff]
    %v70 = vld [vmem:[#allocation2 + $0x38] sm:$0xff]
    %v71 = vld [vmem:[#allocation2 + $0x40] sm:$0xff]
    %v72 = vld [vmem:[#allocation2 + $0x48] sm:$0xff]
    %v73 = vld [vmem:[#allocation2 + $0x50] sm:$0xff]
    %v74 = vld [vmem:[#allocation2 + $0x58] sm:$0xff]
    %v75 = vld [vmem:[#allocation2 + $0x60] sm:$0xff]
    %v76 = vld [vmem:[#allocation2 + $0x68] sm:$0xff]
    %v77 = vld [vmem:[#allocation2 + $0x70] sm:$0xff]
    %v78 = vld [vmem:[#allocation2 + $0x78] sm:$0xff]
    %v79 = vld [vmem:[#allocation7] sm:$0xf]
    %v80 = vld [vmem:[#allocation7 + $0x4] sm:$0xf]
    %v81 = vld [vmem:[#allocation7 + $0x8] sm:$0xf]
    %v82 = vld [vmem:[#allocation7 + $0xc] sm:$0xf]
    %v83 = vld [vmem:[#allocation7 + $0x10] sm:$0xf]
    %v84 = vld [vmem:[#allocation7 + $0x14] sm:$0xf]
    %v85 = vld [vmem:[#allocation7 + $0x18] sm:$0xf]
    %v86 = vld [vmem:[#allocation7 + $0x1c] sm:$0xf]
    %v87 = vld [vmem:[#allocation7 + $0x20] sm:$0xf]
    %v88 = vld [vmem:[#allocation7 + $0x24] sm:$0xf]
    %v89 = vld [vmem:[#allocation7 + $0x28] sm:$0xf]
    %v90 = vld [vmem:[#allocation7 + $0x2c] sm:$0xf]
    %v91 = vld [vmem:[#allocation7 + $0x30] sm:$0xf]
    %v92 = vld [vmem:[#allocation7 + $0x34] sm:$0xf]
    %v93 = vld [vmem:[#allocation7 + $0x38] sm:$0xf]
    %v94 = vld [vmem:[#allocation7 + $0x3c] sm:$0xf]
    %v95 = vpack.c.bf16 %v63, %v63
    %v96 = vpack.c.bf16 %v64, %v64
    %v97 = vpack.c.bf16 %v65, %v65
    %v98 = vpack.c.bf16 %v66, %v66
    %v99 = vpack.c.bf16 %v67, %v67
    %v100 = vpack.c.bf16 %v68, %v68
    %v101 = vpack.c.bf16 %v69, %v69
    %v102 = vpack.c.bf16 %v70, %v70
    %v103 = vpack.c.bf16 %v71, %v71
    %v104 = vpack.c.bf16 %v72, %v72
    %v105 = vpack.c.bf16 %v73, %v73
    %v106 = vpack.c.bf16 %v74, %v74
    %v107 = vpack.c.bf16 %v75, %v75
    %v108 = vpack.c.bf16 %v76, %v76
    %v109 = vpack.c.bf16 %v77, %v77
    %v110 = vpack.c.bf16 %v78, %v78
    %v111 = vunpack.c.l.bf16 %v95
    %v112 = vunpack.c.l.bf16 %v96
    %v113 = vunpack.c.l.bf16 %v97
    %v114 = vunpack.c.l.bf16 %v98
    %v115 = vunpack.c.l.bf16 %v99
    %v116 = vunpack.c.l.bf16 %v100
    %v117 = vunpack.c.l.bf16 %v101
    %v118 = vunpack.c.l.bf16 %v102
    %v119 = vunpack.c.l.bf16 %v103
    %v120 = vunpack.c.l.bf16 %v104
    %v121 = vunpack.c.l.bf16 %v105
    %v122 = vunpack.c.l.bf16 %v106
    %v123 = vunpack.c.l.bf16 %v107
    %v124 = vunpack.c.l.bf16 %v108
    %v125 = vunpack.c.l.bf16 %v109
    %v126 = vunpack.c.l.bf16 %v110
    %v127 = vsub.f32 %v63, %v111
    %v128 = vsub.f32 %v64, %v112
    %v129 = vsub.f32 %v65, %v113
    %v130 = vsub.f32 %v66, %v114
    %v131 = vsub.f32 %v67, %v115
    %v132 = vsub.f32 %v68, %v116
    %v133 = vsub.f32 %v69, %v117
    %v134 = vsub.f32 %v70, %v118
    %v135 = vsub.f32 %v71, %v119
    %v136 = vsub.f32 %v72, %v120
    %v137 = vsub.f32 %v73, %v121
    %v138 = vsub.f32 %v74, %v122
    %v139 = vsub.f32 %v75, %v123
    %v140 = vsub.f32 %v76, %v124
    %v141 = vsub.f32 %v77, %v125
    %v142 = vsub.f32 %v78, %v126
    %v143 = vpack.c.bf16 %v128, %v127
    %v144 = vpack.c.bf16 %v130, %v129
    %v145 = vpack.c.bf16 %v132, %v131
    %v146 = vpack.c.bf16 %v134, %v133
    %v147 = vpack.c.bf16 %v136, %v135
    %v148 = vpack.c.bf16 %v138, %v137
    %v149 = vpack.c.bf16 %v140, %v139
    %v150 = vpack.c.bf16 %v142, %v141
    %v167 = vunpack.c.l.b16 %v79
    %v168 = vunpack.c.l.b16 %v80
    %v169 = vunpack.c.l.b16 %v81
    %v170 = vunpack.c.l.b16 %v82
    %v171 = vunpack.c.l.b16 %v83
    %v172 = vunpack.c.l.b16 %v84
    %v173 = vunpack.c.l.b16 %v85
    %v174 = vunpack.c.l.b16 %v86
    %v175 = vunpack.c.l.b16 %v87
    %v176 = vunpack.c.l.b16 %v88
    %v177 = vunpack.c.l.b16 %v89
    %v178 = vunpack.c.l.b16 %v90
    %v179 = vunpack.c.l.b16 %v91
    %v180 = vunpack.c.l.b16 %v92
    %v181 = vunpack.c.l.b16 %v93
    %v182 = vunpack.c.l.b16 %v94
    %v183 = vpack.c.b16 %v168, %v167
    %v184 = vpack.c.b16 %v170, %v169
    %v185 = vpack.c.b16 %v172, %v171
    %v186 = vpack.c.b16 %v174, %v173
    %v187 = vpack.c.b16 %v176, %v175
    %v188 = vpack.c.b16 %v178, %v177
    %v189 = vpack.c.b16 %v180, %v179
    %v190 = vpack.c.b16 %v182, %v181
    %199 = vmatpush.bf16.msra.mxu0 %v190
    %200 = vmatpush.bf16.msra.mxu0 %v189
    %201 = vmatpush.bf16.msra.mxu0 %v188
    %202 = vmatpush.bf16.msra.mxu0 %v187
    %203 = vmatpush.bf16.msra.mxu0 %v186
    %204 = vmatpush.bf16.msra.mxu0 %v185
    %205 = vmatpush.bf16.msra.mxu0 %v184
    %206 = vmatpush.bf16.msra.mxu0 %v183
    %207 = vmatmul.bf16.gmra.mxu0 %v143
    %v208 = vpop.f32.mrf.mxu0
    %v209 = vadd.f32 0.0, %v208
    %v210 = vpop.f32.mrf.mxu0
    %v211 = vadd.f32 0.0, %v210
    %212 = vmatmul.bf16.gmra.mxu0 %v144
    %v213 = vpop.f32.mrf.mxu0
    %v214 = vadd.f32 0.0, %v213
    %v215 = vpop.f32.mrf.mxu0
    %v216 = vadd.f32 0.0, %v215
    %217 = vmatmul.bf16.gmra.mxu0 %v145
    %v218 = vpop.f32.mrf.mxu0
    %v219 = vadd.f32 0.0, %v218
    %v220 = vpop.f32.mrf.mxu0
    %v221 = vadd.f32 0.0, %v220
    %222 = vmatmul.bf16.gmra.mxu0 %v146
    %v223 = vpop.f32.mrf.mxu0
    %v224 = vadd.f32 0.0, %v223
    %v225 = vpop.f32.mrf.mxu0
    %v226 = vadd.f32 0.0, %v225
    %227 = vmatmul.bf16.gmra.mxu0 %v147
    %v228 = vpop.f32.mrf.mxu0
    %v229 = vadd.f32 0.0, %v228
    %v230 = vpop.f32.mrf.mxu0
    %v231 = vadd.f32 0.0, %v230
    %232 = vmatmul.bf16.gmra.mxu0 %v148
    %v233 = vpop.f32.mrf.mxu0
    %v234 = vadd.f32 0.0, %v233
    %v235 = vpop.f32.mrf.mxu0
    %v236 = vadd.f32 0.0, %v235
    %237 = vmatmul.bf16.gmra.mxu0 %v149
    %v238 = vpop.f32.mrf.mxu0
    %v239 = vadd.f32 0.0, %v238
    %v240 = vpop.f32.mrf.mxu0
    %v241 = vadd.f32 0.0, %v240
    %242 = vmatmul.bf16.gmra.mxu0 %v150
    %v243 = vpop.f32.mrf.mxu0
    %v244 = vadd.f32 0.0, %v243
    %v245 = vpop.f32.mrf.mxu0
    %v246 = vadd.f32 0.0, %v245
    %247 = vdwg.mxu0
    %v264 = vunpack.c.l.b16 %v95
    %v265 = vunpack.c.l.b16 %v96
    %v266 = vunpack.c.l.b16 %v97
    %v267 = vunpack.c.l.b16 %v98
    %v268 = vunpack.c.l.b16 %v99
    %v269 = vunpack.c.l.b16 %v100
    %v270 = vunpack.c.l.b16 %v101
    %v271 = vunpack.c.l.b16 %v102
    %v272 = vunpack.c.l.b16 %v103
    %v273 = vunpack.c.l.b16 %v104
    %v274 = vunpack.c.l.b16 %v105
    %v275 = vunpack.c.l.b16 %v106
    %v276 = vunpack.c.l.b16 %v107
    %v277 = vunpack.c.l.b16 %v108
    %v278 = vunpack.c.l.b16 %v109
    %v279 = vunpack.c.l.b16 %v110
    %v280 = vpack.c.b16 %v265, %v264
    %v281 = vpack.c.b16 %v267, %v266
    %v282 = vpack.c.b16 %v269, %v268
    %v283 = vpack.c.b16 %v271, %v270
    %v284 = vpack.c.b16 %v273, %v272
    %v285 = vpack.c.b16 %v275, %v274
    %v286 = vpack.c.b16 %v277, %v276
    %v287 = vpack.c.b16 %v279, %v278
    %296 = vmatpush.bf16.msra.mxu0 %v190
    %297 = vmatpush.bf16.msra.mxu0 %v189
    %298 = vmatpush.bf16.msra.mxu0 %v188
    %299 = vmatpush.bf16.msra.mxu0 %v187
    %300 = vmatpush.bf16.msra.mxu0 %v186
    %301 = vmatpush.bf16.msra.mxu0 %v185
    %302 = vmatpush.bf16.msra.mxu0 %v184
    %303 = vmatpush.bf16.msra.mxu0 %v183
    %304 = vmatmul.bf16.gmra.mxu0 %v280
    %v305 = vpop.f32.mrf.mxu0
    %v306 = vadd.f32 %v209, %v305
    %v307 = vpop.f32.mrf.mxu0
    %v308 = vadd.f32 %v211, %v307
    %309 = vmatmul.bf16.gmra.mxu0 %v281
    %v310 = vpop.f32.mrf.mxu0
    %v311 = vadd.f32 %v214, %v310
    %v312 = vpop.f32.mrf.mxu0
    %v313 = vadd.f32 %v216, %v312
    %314 = vmatmul.bf16.gmra.mxu0 %v282
    %v315 = vpop.f32.mrf.mxu0
    %v316 = vadd.f32 %v219, %v315
    %v317 = vpop.f32.mrf.mxu0
    %v318 = vadd.f32 %v221, %v317
    %319 = vmatmul.bf16.gmra.mxu0 %v283
    %v320 = vpop.f32.mrf.mxu0
    %v321 = vadd.f32 %v224, %v320
    %v322 = vpop.f32.mrf.mxu0
    %v323 = vadd.f32 %v226, %v322
    %324 = vmatmul.bf16.gmra.mxu0 %v284
    %v325 = vpop.f32.mrf.mxu0
    %v326 = vadd.f32 %v229, %v325
    %v327 = vpop.f32.mrf.mxu0
    %v328 = vadd.f32 %v231, %v327
    %329 = vmatmul.bf16.gmra.mxu0 %v285
    %v330 = vpop.f32.mrf.mxu0
    %v331 = vadd.f32 %v234, %v330
    %v332 = vpop.f32.mrf.mxu0
    %v333 = vadd.f32 %v236, %v332
    %334 = vmatmul.bf16.gmra.mxu0 %v286
    %v335 = vpop.f32.mrf.mxu0
    %v336 = vadd.f32 %v239, %v335
    %v337 = vpop.f32.mrf.mxu0
    %v338 = vadd.f32 %v241, %v337
    %339 = vmatmul.bf16.gmra.mxu0 %v287
    %v340 = vpop.f32.mrf.mxu0
    %v341 = vadd.f32 %v244, %v340
    %v342 = vpop.f32.mrf.mxu0
    %v343 = vadd.f32 %v246, %v342
    %344 = vdwg.mxu0
    %v345 = vmul.f32 %v306, 0.03125
    %v346 = vmul.f32 %v308, 0.03125
    %v347 = vmul.f32 %v311, 0.03125
    %v348 = vmul.f32 %v313, 0.03125
    %v349 = vmul.f32 %v316, 0.03125
    %v350 = vmul.f32 %v318, 0.03125
    %v351 = vmul.f32 %v321, 0.03125
    %v352 = vmul.f32 %v323, 0.03125
    %v353 = vmul.f32 %v326, 0.03125
    %v354 = vmul.f32 %v328, 0.03125
    %v355 = vmul.f32 %v331, 0.03125
    %v356 = vmul.f32 %v333, 0.03125
    %v357 = vmul.f32 %v336, 0.03125
    %v358 = vmul.f32 %v338, 0.03125
    %v359 = vmul.f32 %v341, 0.03125
    %v360 = vmul.f32 %v343, 0.03125
    %v361 = vmul.f32 %v63, %v63
    %v362 = vmul.f32 %v64, %v64
    %v363 = vmul.f32 %v65, %v65
    %v364 = vmul.f32 %v66, %v66
    %v365 = vmul.f32 %v67, %v67
    %v366 = vmul.f32 %v68, %v68
    %v367 = vmul.f32 %v69, %v69
    %v368 = vmul.f32 %v70, %v70
    %v369 = vmul.f32 %v71, %v71
    %v370 = vmul.f32 %v72, %v72
    %v371 = vmul.f32 %v73, %v73
    %v372 = vmul.f32 %v74, %v74
    %v373 = vmul.f32 %v75, %v75
    %v374 = vmul.f32 %v76, %v76
    %v375 = vmul.f32 %v77, %v77
    %v376 = vmul.f32 %v78, %v78
    %v377 = vpack.c.bf16 %v361, %v361
    %v378 = vpack.c.bf16 %v362, %v362
    %v379 = vpack.c.bf16 %v363, %v363
    %v380 = vpack.c.bf16 %v364, %v364
    %v381 = vpack.c.bf16 %v365, %v365
    %v382 = vpack.c.bf16 %v366, %v366
    %v383 = vpack.c.bf16 %v367, %v367
    %v384 = vpack.c.bf16 %v368, %v368
    %v385 = vpack.c.bf16 %v369, %v369
    %v386 = vpack.c.bf16 %v370, %v370
    %v387 = vpack.c.bf16 %v371, %v371
    %v388 = vpack.c.bf16 %v372, %v372
    %v389 = vpack.c.bf16 %v373, %v373
    %v390 = vpack.c.bf16 %v374, %v374
    %v391 = vpack.c.bf16 %v375, %v375
    %v392 = vpack.c.bf16 %v376, %v376
    %v393 = vunpack.c.l.bf16 %v377
    %v394 = vunpack.c.l.bf16 %v378
    %v395 = vunpack.c.l.bf16 %v379
    %v396 = vunpack.c.l.bf16 %v380
    %v397 = vunpack.c.l.bf16 %v381
    %v398 = vunpack.c.l.bf16 %v382
    %v399 = vunpack.c.l.bf16 %v383
    %v400 = vunpack.c.l.bf16 %v384
    %v401 = vunpack.c.l.bf16 %v385
    %v402 = vunpack.c.l.bf16 %v386
    %v403 = vunpack.c.l.bf16 %v387
    %v404 = vunpack.c.l.bf16 %v388
    %v405 = vunpack.c.l.bf16 %v389
    %v406 = vunpack.c.l.bf16 %v390
    %v407 = vunpack.c.l.bf16 %v391
    %v408 = vunpack.c.l.bf16 %v392
    %v409 = vsub.f32 %v361, %v393
    %v410 = vsub.f32 %v362, %v394
    %v411 = vsub.f32 %v363, %v395
    %v412 = vsub.f32 %v364, %v396
    %v413 = vsub.f32 %v365, %v397
    %v414 = vsub.f32 %v366, %v398
    %v415 = vsub.f32 %v367, %v399
    %v416 = vsub.f32 %v368, %v400
    %v417 = vsub.f32 %v369, %v401
    %v418 = vsub.f32 %v370, %v402
    %v419 = vsub.f32 %v371, %v403
    %v420 = vsub.f32 %v372, %v404
    %v421 = vsub.f32 %v373, %v405
    %v422 = vsub.f32 %v374, %v406
    %v423 = vsub.f32 %v375, %v407
    %v424 = vsub.f32 %v376, %v408
    %v425 = vpack.c.bf16 %v410, %v409
    %v426 = vpack.c.bf16 %v412, %v411
    %v427 = vpack.c.bf16 %v414, %v413
    %v428 = vpack.c.bf16 %v416, %v415
    %v429 = vpack.c.bf16 %v418, %v417
    %v430 = vpack.c.bf16 %v420, %v419
    %v431 = vpack.c.bf16 %v422, %v421
    %v432 = vpack.c.bf16 %v424, %v423
    %433 = vmatpush.bf16.msra.mxu0 %v190
    %434 = vmatpush.bf16.msra.mxu0 %v189
    %435 = vmatpush.bf16.msra.mxu0 %v188
    %436 = vmatpush.bf16.msra.mxu0 %v187
    %437 = vmatpush.bf16.msra.mxu0 %v186
    %438 = vmatpush.bf16.msra.mxu0 %v185
    %439 = vmatpush.bf16.msra.mxu0 %v184
    %440 = vmatpush.bf16.msra.mxu0 %v183
    %441 = vmatmul.bf16.gmra.mxu0 %v425
    %v442 = vpop.f32.mrf.mxu0
    %v443 = vadd.f32 0.0, %v442
    %v444 = vpop.f32.mrf.mxu0
    %v445 = vadd.f32 0.0, %v444
    %446 = vmatmul.bf16.gmra.mxu0 %v426
    %v447 = vpop.f32.mrf.mxu0
    %v448 = vadd.f32 0.0, %v447
    %v449 = vpop.f32.mrf.mxu0
    %v450 = vadd.f32 0.0, %v449
    %451 = vmatmul.bf16.gmra.mxu0 %v427
    %v452 = vpop.f32.mrf.mxu0
    %v453 = vadd.f32 0.0, %v452
    %v454 = vpop.f32.mrf.mxu0
    %v455 = vadd.f32 0.0, %v454
    %456 = vmatmul.bf16.gmra.mxu0 %v428
    %v457 = vpop.f32.mrf.mxu0
    %v458 = vadd.f32 0.0, %v457
    %v459 = vpop.f32.mrf.mxu0
    %v460 = vadd.f32 0.0, %v459
    %461 = vmatmul.bf16.gmra.mxu0 %v429
    %v462 = vpop.f32.mrf.mxu0
    %v463 = vadd.f32 0.0, %v462
    %v464 = vpop.f32.mrf.mxu0
    %v465 = vadd.f32 0.0, %v464
    %466 = vmatmul.bf16.gmra.mxu0 %v430
    %v467 = vpop.f32.mrf.mxu0
    %v468 = vadd.f32 0.0, %v467
    %v469 = vpop.f32.mrf.mxu0
    %v470 = vadd.f32 0.0, %v469
    %471 = vmatmul.bf16.gmra.mxu0 %v431
    %v472 = vpop.f32.mrf.mxu0
    %v473 = vadd.f32 0.0, %v472
    %v474 = vpop.f32.mrf.mxu0
    %v475 = vadd.f32 0.0, %v474
    %476 = vmatmul.bf16.gmra.mxu0 %v432
    %v477 = vpop.f32.mrf.mxu0
    %v478 = vadd.f32 0.0, %v477
    %v479 = vpop.f32.mrf.mxu0
    %v480 = vadd.f32 0.0, %v479
    %481 = vdwg.mxu0
    %v498 = vunpack.c.l.b16 %v377
    %v499 = vunpack.c.l.b16 %v378
    %v500 = vunpack.c.l.b16 %v379
    %v501 = vunpack.c.l.b16 %v380
    %v502 = vunpack.c.l.b16 %v381
    %v503 = vunpack.c.l.b16 %v382
    %v504 = vunpack.c.l.b16 %v383
    %v505 = vunpack.c.l.b16 %v384
    %v506 = vunpack.c.l.b16 %v385
    %v507 = vunpack.c.l.b16 %v386
    %v508 = vunpack.c.l.b16 %v387
    %v509 = vunpack.c.l.b16 %v388
    %v510 = vunpack.c.l.b16 %v389
    %v511 = vunpack.c.l.b16 %v390
    %v512 = vunpack.c.l.b16 %v391
    %v513 = vunpack.c.l.b16 %v392
    %v514 = vpack.c.b16 %v499, %v498
    %v515 = vpack.c.b16 %v501, %v500
    %v516 = vpack.c.b16 %v503, %v502
    %v517 = vpack.c.b16 %v505, %v504
    %v518 = vpack.c.b16 %v507, %v506
    %v519 = vpack.c.b16 %v509, %v508
    %v520 = vpack.c.b16 %v511, %v510
    %v521 = vpack.c.b16 %v513, %v512
    %530 = vmatpush.bf16.msra.mxu0 %v190
    %531 = vmatpush.bf16.msra.mxu0 %v189
    %532 = vmatpush.bf16.msra.mxu0 %v188
    %533 = vmatpush.bf16.msra.mxu0 %v187
    %534 = vmatpush.bf16.msra.mxu0 %v186
    %535 = vmatpush.bf16.msra.mxu0 %v185
    %536 = vmatpush.bf16.msra.mxu0 %v184
    %537 = vmatpush.bf16.msra.mxu0 %v183
    %538 = vmatmul.bf16.gmra.mxu0 %v514
    %v539 = vpop.f32.mrf.mxu0
    %v540 = vadd.f32 %v443, %v539
    %v541 = vpop.f32.mrf.mxu0
    %v542 = vadd.f32 %v445, %v541
    %543 = vmatmul.bf16.gmra.mxu0 %v515
    %v544 = vpop.f32.mrf.mxu0
    %v545 = vadd.f32 %v448, %v544
    %v546 = vpop.f32.mrf.mxu0
    %v547 = vadd.f32 %v450, %v546
    %548 = vmatmul.bf16.gmra.mxu0 %v516
    %v549 = vpop.f32.mrf.mxu0
    %v550 = vadd.f32 %v453, %v549
    %v551 = vpop.f32.mrf.mxu0
    %v552 = vadd.f32 %v455, %v551
    %553 = vmatmul.bf16.gmra.mxu0 %v517
    %v554 = vpop.f32.mrf.mxu0
    %v555 = vadd.f32 %v458, %v554
    %v556 = vpop.f32.mrf.mxu0
    %v557 = vadd.f32 %v460, %v556
    %558 = vmatmul.bf16.gmra.mxu0 %v518
    %v559 = vpop.f32.mrf.mxu0
    %v560 = vadd.f32 %v463, %v559
    %v561 = vpop.f32.mrf.mxu0
    %v562 = vadd.f32 %v465, %v561
    %563 = vmatmul.bf16.gmra.mxu0 %v519
    %v564 = vpop.f32.mrf.mxu0
    %v565 = vadd.f32 %v468, %v564
    %v566 = vpop.f32.mrf.mxu0
    %v567 = vadd.f32 %v470, %v566
    %568 = vmatmul.bf16.gmra.mxu0 %v520
    %v569 = vpop.f32.mrf.mxu0
    %v570 = vadd.f32 %v473, %v569
    %v571 = vpop.f32.mrf.mxu0
    %v572 = vadd.f32 %v475, %v571
    %573 = vmatmul.bf16.gmra.mxu0 %v521
    %v574 = vpop.f32.mrf.mxu0
    %v575 = vadd.f32 %v478, %v574
    %v576 = vpop.f32.mrf.mxu0
    %v577 = vadd.f32 %v480, %v576
    %578 = vdwg.mxu0
    %v579 = vmul.f32 %v540, 0.03125
    %v580 = vmul.f32 %v542, 0.03125
    %v581 = vmul.f32 %v545, 0.03125
    %v582 = vmul.f32 %v547, 0.03125
    %v583 = vmul.f32 %v550, 0.03125
    %v584 = vmul.f32 %v552, 0.03125
    %v585 = vmul.f32 %v555, 0.03125
    %v586 = vmul.f32 %v557, 0.03125
    %v587 = vmul.f32 %v560, 0.03125
    %v588 = vmul.f32 %v562, 0.03125
    %v589 = vmul.f32 %v565, 0.03125
    %v590 = vmul.f32 %v567, 0.03125
    %v591 = vmul.f32 %v570, 0.03125
    %v592 = vmul.f32 %v572, 0.03125
    %v593 = vmul.f32 %v575, 0.03125
    %v594 = vmul.f32 %v577, 0.03125
    %v595 = vmul.f32 %v345, %v345
    %v596 = vmul.f32 %v346, %v346
    %v597 = vmul.f32 %v347, %v347
    %v598 = vmul.f32 %v348, %v348
    %v599 = vmul.f32 %v349, %v349
    %v600 = vmul.f32 %v350, %v350
    %v601 = vmul.f32 %v351, %v351
    %v602 = vmul.f32 %v352, %v352
    %v603 = vmul.f32 %v353, %v353
    %v604 = vmul.f32 %v354, %v354
    %v605 = vmul.f32 %v355, %v355
    %v606 = vmul.f32 %v356, %v356
    %v607 = vmul.f32 %v357, %v357
    %v608 = vmul.f32 %v358, %v358
    %v609 = vmul.f32 %v359, %v359
    %v610 = vmul.f32 %v360, %v360
    %v611 = vsub.f32 %v579, %v595
    %v612 = vsub.f32 %v580, %v596
    %v613 = vsub.f32 %v581, %v597
    %v614 = vsub.f32 %v582, %v598
    %v615 = vsub.f32 %v583, %v599
    %v616 = vsub.f32 %v584, %v600
    %v617 = vsub.f32 %v585, %v601
    %v618 = vsub.f32 %v586, %v602
    %v619 = vsub.f32 %v587, %v603
    %v620 = vsub.f32 %v588, %v604
    %v621 = vsub.f32 %v589, %v605
    %v622 = vsub.f32 %v590, %v606
    %v623 = vsub.f32 %v591, %v607
    %v624 = vsub.f32 %v592, %v608
    %v625 = vsub.f32 %v593, %v609
    %v626 = vsub.f32 %v594, %v610
    %v627 = vmax.f32 %v611, 0.0
    %v628 = vmax.f32 %v612, 0.0
    %v629 = vmax.f32 %v613, 0.0
    %v630 = vmax.f32 %v614, 0.0
    %v631 = vmax.f32 %v615, 0.0
    %v632 = vmax.f32 %v616, 0.0
    %v633 = vmax.f32 %v617, 0.0
    %v634 = vmax.f32 %v618, 0.0
    %v635 = vmax.f32 %v619, 0.0
    %v636 = vmax.f32 %v620, 0.0
    %v637 = vmax.f32 %v621, 0.0
    %v638 = vmax.f32 %v622, 0.0
    %v639 = vmax.f32 %v623, 0.0
    %v640 = vmax.f32 %v624, 0.0
    %v641 = vmax.f32 %v625, 0.0
    %v642 = vmax.f32 %v626, 0.0
    %v643 = vadd.f32 %v627, 1e-05
    %v644 = vadd.f32 %v628, 1e-05
    %v645 = vadd.f32 %v629, 1e-05
    %v646 = vadd.f32 %v630, 1e-05
    %v647 = vadd.f32 %v631, 1e-05
    %v648 = vadd.f32 %v632, 1e-05
    %v649 = vadd.f32 %v633, 1e-05
    %v650 = vadd.f32 %v634, 1e-05
    %v651 = vadd.f32 %v635, 1e-05
    %v652 = vadd.f32 %v636, 1e-05
    %v653 = vadd.f32 %v637, 1e-05
    %v654 = vadd.f32 %v638, 1e-05
    %v655 = vadd.f32 %v639, 1e-05
    %v656 = vadd.f32 %v640, 1e-05
    %v657 = vadd.f32 %v641, 1e-05
    %v658 = vadd.f32 %v642, 1e-05
    %v659 = vrsqrt.pop %v643
    %v660 = vmul.f32 %v659, %v643
    %v661 = vmul.f32 %v660, %v659
    %v662 = vmul.f32 0.5, %v661
    %v663 = vsub.f32 1.5, %v662
    %v664 = vmul.f32 %v659, %v663
    %vm665 = vweird.f32 %v643
    %vm666 = vweird.f32 %v659
    %vm667 = vmor %vm665, %vm666
    %v668 = vsel %vm667, %v659, %v664
    %v669 = vrsqrt.pop %v644
    %v670 = vmul.f32 %v669, %v644
    %v671 = vmul.f32 %v670, %v669
    %v672 = vmul.f32 0.5, %v671
    %v673 = vsub.f32 1.5, %v672
    %v674 = vmul.f32 %v669, %v673
    %vm675 = vweird.f32 %v644
    %vm676 = vweird.f32 %v669
    %vm677 = vmor %vm675, %vm676
    %v678 = vsel %vm677, %v669, %v674
    %v679 = vrsqrt.pop %v645
    %v680 = vmul.f32 %v679, %v645
    %v681 = vmul.f32 %v680, %v679
    %v682 = vmul.f32 0.5, %v681
    %v683 = vsub.f32 1.5, %v682
    %v684 = vmul.f32 %v679, %v683
    %vm685 = vweird.f32 %v645
    %vm686 = vweird.f32 %v679
    %vm687 = vmor %vm685, %vm686
    %v688 = vsel %vm687, %v679, %v684
    %v689 = vrsqrt.pop %v646
    %v690 = vmul.f32 %v689, %v646
    %v691 = vmul.f32 %v690, %v689
    %v692 = vmul.f32 0.5, %v691
    %v693 = vsub.f32 1.5, %v692
    %v694 = vmul.f32 %v689, %v693
    %vm695 = vweird.f32 %v646
    %vm696 = vweird.f32 %v689
    %vm697 = vmor %vm695, %vm696
    %v698 = vsel %vm697, %v689, %v694
    %v699 = vrsqrt.pop %v647
    %v700 = vmul.f32 %v699, %v647
    %v701 = vmul.f32 %v700, %v699
    %v702 = vmul.f32 0.5, %v701
    %v703 = vsub.f32 1.5, %v702
    %v704 = vmul.f32 %v699, %v703
    %vm705 = vweird.f32 %v647
    %vm706 = vweird.f32 %v699
    %vm707 = vmor %vm705, %vm706
    %v708 = vsel %vm707, %v699, %v704
    %v709 = vrsqrt.pop %v648
    %v710 = vmul.f32 %v709, %v648
    %v711 = vmul.f32 %v710, %v709
    %v712 = vmul.f32 0.5, %v711
    %v713 = vsub.f32 1.5, %v712
    %v714 = vmul.f32 %v709, %v713
    %vm715 = vweird.f32 %v648
    %vm716 = vweird.f32 %v709
    %vm717 = vmor %vm715, %vm716
    %v718 = vsel %vm717, %v709, %v714
    %v719 = vrsqrt.pop %v649
    %v720 = vmul.f32 %v719, %v649
    %v721 = vmul.f32 %v720, %v719
    %v722 = vmul.f32 0.5, %v721
    %v723 = vsub.f32 1.5, %v722
    %v724 = vmul.f32 %v719, %v723
    %vm725 = vweird.f32 %v649
    %vm726 = vweird.f32 %v719
    %vm727 = vmor %vm725, %vm726
    %v728 = vsel %vm727, %v719, %v724
    %v729 = vrsqrt.pop %v650
    %v730 = vmul.f32 %v729, %v650
    %v731 = vmul.f32 %v730, %v729
    %v732 = vmul.f32 0.5, %v731
    %v733 = vsub.f32 1.5, %v732
    %v734 = vmul.f32 %v729, %v733
    %vm735 = vweird.f32 %v650
    %vm736 = vweird.f32 %v729
    %vm737 = vmor %vm735, %vm736
    %v738 = vsel %vm737, %v729, %v734
    %v739 = vrsqrt.pop %v651
    %v740 = vmul.f32 %v739, %v651
    %v741 = vmul.f32 %v740, %v739
    %v742 = vmul.f32 0.5, %v741
    %v743 = vsub.f32 1.5, %v742
    %v744 = vmul.f32 %v739, %v743
    %vm745 = vweird.f32 %v651
    %vm746 = vweird.f32 %v739
    %vm747 = vmor %vm745, %vm746
    %v748 = vsel %vm747, %v739, %v744
    %v749 = vrsqrt.pop %v652
    %v750 = vmul.f32 %v749, %v652
    %v751 = vmul.f32 %v750, %v749
    %v752 = vmul.f32 0.5, %v751
    %v753 = vsub.f32 1.5, %v752
    %v754 = vmul.f32 %v749, %v753
    %vm755 = vweird.f32 %v652
    %vm756 = vweird.f32 %v749
    %vm757 = vmor %vm755, %vm756
    %v758 = vsel %vm757, %v749, %v754
    %v759 = vrsqrt.pop %v653
    %v760 = vmul.f32 %v759, %v653
    %v761 = vmul.f32 %v760, %v759
    %v762 = vmul.f32 0.5, %v761
    %v763 = vsub.f32 1.5, %v762
    %v764 = vmul.f32 %v759, %v763
    %vm765 = vweird.f32 %v653
    %vm766 = vweird.f32 %v759
    %vm767 = vmor %vm765, %vm766
    %v768 = vsel %vm767, %v759, %v764
    %v769 = vrsqrt.pop %v654
    %v770 = vmul.f32 %v769, %v654
    %v771 = vmul.f32 %v770, %v769
    %v772 = vmul.f32 0.5, %v771
    %v773 = vsub.f32 1.5, %v772
    %v774 = vmul.f32 %v769, %v773
    %vm775 = vweird.f32 %v654
    %vm776 = vweird.f32 %v769
    %vm777 = vmor %vm775, %vm776
    %v778 = vsel %vm777, %v769, %v774
    %v779 = vrsqrt.pop %v655
    %v780 = vmul.f32 %v779, %v655
    %v781 = vmul.f32 %v780, %v779
    %v782 = vmul.f32 0.5, %v781
    %v783 = vsub.f32 1.5, %v782
    %v784 = vmul.f32 %v779, %v783
    %vm785 = vweird.f32 %v655
    %vm786 = vweird.f32 %v779
    %vm787 = vmor %vm785, %vm786
    %v788 = vsel %vm787, %v779, %v784
    %v789 = vrsqrt.pop %v656
    %v790 = vmul.f32 %v789, %v656
    %v791 = vmul.f32 %v790, %v789
    %v792 = vmul.f32 0.5, %v791
    %v793 = vsub.f32 1.5, %v792
    %v794 = vmul.f32 %v789, %v793
    %vm795 = vweird.f32 %v656
    %vm796 = vweird.f32 %v789
    %vm797 = vmor %vm795, %vm796
    %v798 = vsel %vm797, %v789, %v794
    %v799 = vrsqrt.pop %v657
    %v800 = vmul.f32 %v799, %v657
    %v801 = vmul.f32 %v800, %v799
    %v802 = vmul.f32 0.5, %v801
    %v803 = vsub.f32 1.5, %v802
    %v804 = vmul.f32 %v799, %v803
    %vm805 = vweird.f32 %v657
    %vm806 = vweird.f32 %v799
    %vm807 = vmor %vm805, %vm806
    %v808 = vsel %vm807, %v799, %v804
    %v809 = vrsqrt.pop %v658
    %v810 = vmul.f32 %v809, %v658
    %v811 = vmul.f32 %v810, %v809
    %v812 = vmul.f32 0.5, %v811
    %v813 = vsub.f32 1.5, %v812
    %v814 = vmul.f32 %v809, %v813
    %vm815 = vweird.f32 %v658
    %vm816 = vweird.f32 %v809
    %vm817 = vmor %vm815, %vm816
    %v818 = vsel %vm817, %v809, %v814
    %v819 = vld [vmem:[#allocation5] sm:$0x1]
    %v820 = vld [vmem:[%s2] sm:$0x1]
    %v821 = vsub.f32 %v63, %v345
    %v822 = vsub.f32 %v64, %v346
    %v823 = vsub.f32 %v65, %v347
    %v824 = vsub.f32 %v66, %v348
    %v825 = vsub.f32 %v67, %v349
    %v826 = vsub.f32 %v68, %v350
    %v827 = vsub.f32 %v69, %v351
    %v828 = vsub.f32 %v70, %v352
    %v829 = vsub.f32 %v71, %v353
    %v830 = vsub.f32 %v72, %v354
    %v831 = vsub.f32 %v73, %v355
    %v832 = vsub.f32 %v74, %v356
    %v833 = vsub.f32 %v75, %v357
    %v834 = vsub.f32 %v76, %v358
    %v835 = vsub.f32 %v77, %v359
    %v836 = vsub.f32 %v78, %v360
    %v837 = vmul.f32 %v821, %v668
    %v838 = vmul.f32 %v822, %v678
    %v839 = vmul.f32 %v823, %v688
    %v840 = vmul.f32 %v824, %v698
    %v841 = vmul.f32 %v825, %v708
    %v842 = vmul.f32 %v826, %v718
    %v843 = vmul.f32 %v827, %v728
    %v844 = vmul.f32 %v828, %v738
    %v845 = vmul.f32 %v829, %v748
    %v846 = vmul.f32 %v830, %v758
    %v847 = vmul.f32 %v831, %v768
    %v848 = vmul.f32 %v832, %v778
    %v849 = vmul.f32 %v833, %v788
    %v850 = vmul.f32 %v834, %v798
    %v851 = vmul.f32 %v835, %v808
    %v852 = vmul.f32 %v836, %v818
    %v854 = vperm.slane %v819, 0
    %v856 = vmul.f32 %v837, %v854
    %v857 = vmul.f32 %v838, %v854
    %v858 = vmul.f32 %v839, %v854
    %v859 = vmul.f32 %v840, %v854
    %v860 = vmul.f32 %v841, %v854
    %v861 = vmul.f32 %v842, %v854
    %v862 = vmul.f32 %v843, %v854
    %v863 = vmul.f32 %v844, %v854
    %v864 = vmul.f32 %v845, %v854
    %v865 = vmul.f32 %v846, %v854
    %v866 = vmul.f32 %v847, %v854
    %v867 = vmul.f32 %v848, %v854
    %v868 = vmul.f32 %v849, %v854
    %v869 = vmul.f32 %v850, %v854
    %v870 = vmul.f32 %v851, %v854
    %v871 = vmul.f32 %v852, %v854
    %v873 = vperm.slane %v820, 0
    %v875 = vadd.f32 %v856, %v873
    %v876 = vadd.f32 %v857, %v873
    %v877 = vadd.f32 %v858, %v873
    %v878 = vadd.f32 %v859, %v873
    %v879 = vadd.f32 %v860, %v873
    %v880 = vadd.f32 %v861, %v873
    %v881 = vadd.f32 %v862, %v873
    %v882 = vadd.f32 %v863, %v873
    %v883 = vadd.f32 %v864, %v873
    %v884 = vadd.f32 %v865, %v873
    %v885 = vadd.f32 %v866, %v873
    %v886 = vadd.f32 %v867, %v873
    %v887 = vadd.f32 %v868, %v873
    %v888 = vadd.f32 %v869, %v873
    %v889 = vadd.f32 %v870, %v873
    %v890 = vadd.f32 %v871, %v873
    %891 = vst [vmem:[#allocation8] sm:$0xff] %v875
    %892 = vst [vmem:[#allocation8 + $0x8] sm:$0xff] %v876
    %893 = vst [vmem:[#allocation8 + $0x10] sm:$0xff] %v877
    %894 = vst [vmem:[#allocation8 + $0x18] sm:$0xff] %v878
    %895 = vst [vmem:[#allocation8 + $0x20] sm:$0xff] %v879
    %896 = vst [vmem:[#allocation8 + $0x28] sm:$0xff] %v880
    %897 = vst [vmem:[#allocation8 + $0x30] sm:$0xff] %v881
    %898 = vst [vmem:[#allocation8 + $0x38] sm:$0xff] %v882
    %899 = vst [vmem:[#allocation8 + $0x40] sm:$0xff] %v883
    %900 = vst [vmem:[#allocation8 + $0x48] sm:$0xff] %v884
    %901 = vst [vmem:[#allocation8 + $0x50] sm:$0xff] %v885
    %902 = vst [vmem:[#allocation8 + $0x58] sm:$0xff] %v886
    %903 = vst [vmem:[#allocation8 + $0x60] sm:$0xff] %v887
    %904 = vst [vmem:[#allocation8 + $0x68] sm:$0xff] %v888
    %905 = vst [vmem:[#allocation8 + $0x70] sm:$0xff] %v889
    %906 = vst [vmem:[#allocation8 + $0x78] sm:$0xff] %v890
    // Predicated region
    $region30: #{tpu_custom_call.1} parent=1 // pred_check
      _
    $region31: #{tpu_custom_call.1} parent=1 // pred_check_branch
      %908 = sbr.rel (0) target = $region33
    $region32: #{tpu_custom_call.1} parent=1 // pred_region
      %910 = vsyncadd [#allocation4], 0
      %s911 = sshll.u32 [#allocation8], 4
      %s912 = int_to_ptr.vmem [resolvable:$true] %s911
      %s913 = sshll.u32 %s4, 4
      %s914 = int_to_ptr.hbm [resolvable:$true] %s913
      %919 = dma.vmem_to_hbm [thread:$0]  %s912, 2048, %s914, [#allocation4], 128, 128, 8
    $region33: #{tpu_custom_call.1} parent=1 // pred_fallthru
      _
    // Predicated region
    $region34: #{tpu_custom_call.1} parent=1 // pred_check
      _
    $region35: #{tpu_custom_call.1} parent=1 // pred_check_branch
      %921 = sbr.rel (0) target = $region37
    $region36: #{tpu_custom_call.1} parent=1 // pred_region
      %923 = dma.done [#allocation4], 2048
    $region37: #{tpu_custom_call.1} parent=1 // pred_fallthru
      _
    %924 = vsyncpa [#allocation3], 1
    %925 = vsyncpa [#allocation6], 1
    %926 = vsyncpa [#allocation4], 1

</llo_original>
